<compile_context>
chip_gen: v5e
topology: v5e:2x2
jax: 0.10.0
libtpu: 0.0.40
codegen_flags: <defaults>
</compile_context>

<pallas_src>
import functools

import jax
import jax.numpy as jnp
from jax.experimental import pallas as pl
from jax.experimental.pallas import tpu as pltpu

_LANE = 128                       # pad every feature dim to a multiple of this
_VMEM_LIMIT = 32 * 1024 * 1024    # explicit scoped-VMEM budget (safe on v5e/v6e/v7x)


def _round_up(x, m):
    return (x + m - 1) // m * m


def _gcn_layer_kernel(a_ref, h_ref, w_ref, b_ref, out_ref, acc_ref):
    """One GCN layer: accumulate A@H over k, then (.@W + b, ReLU) at the last k.

    grid = (row_tiles, k_tiles); k (neighbor-block reduction) is the LAST axis.
      a_ref:  [TM, TK]    bf16  tile of normalized adjacency
      h_ref:  [TK, F_in]  bf16  node-feature column block
      w_ref:  [F_in, F_out] f32 (VMEM-resident across the grid)
      b_ref:  [1, F_out]  f32
      out_ref:[TM, F_out] bf16
      acc_ref:[TM, F_in]  f32 scratch accumulator for A@H
    """
    k = pl.program_id(1)

    @pl.when(k == 0)
    def _():
        acc_ref[...] = jnp.zeros_like(acc_ref)

    # bf16 x bf16 -> f32 accumulate on the MXU: the O(N^2 F) hot loop.
    acc_ref[...] += jnp.dot(a_ref[...], h_ref[...],
                            preferred_element_type=jnp.float32)

    @pl.when(k == pl.num_programs(1) - 1)
    def _():
        # (A@H) @ W == A @ (H@W); the weight matmul is cheap, keep it f32.
        h_out = jnp.dot(acc_ref[...], w_ref[...],
                        preferred_element_type=jnp.float32) + b_ref[...]
        # ReLU; dropout is identity in eval mode.
        out_ref[...] = jnp.maximum(h_out, 0.0).astype(out_ref.dtype)


def _gcn_final_kernel(output_dim, a_ref, h_ref, w2_ref, b2_ref, wf_ref, bf_ref,
                      out_ref, acc_ref):
    """conv2 + ReLU + fc + log_softmax, fused; padded output lanes are masked."""
    k = pl.program_id(1)

    @pl.when(k == 0)
    def _():
        acc_ref[...] = jnp.zeros_like(acc_ref)

    acc_ref[...] += jnp.dot(a_ref[...], h_ref[...],
                            preferred_element_type=jnp.float32)

    @pl.when(k == pl.num_programs(1) - 1)
    def _():
        h2 = jnp.dot(acc_ref[...], w2_ref[...],
                     preferred_element_type=jnp.float32) + b2_ref[...]
        h2 = jnp.maximum(h2, 0.0)                      # ReLU after conv2 (per spec)
        logits = jnp.dot(h2, wf_ref[...],
                         preferred_element_type=jnp.float32) + bf_ref[...]
        # Mask padded classes so log_softmax only sees the real output_dim lanes.
        col = jax.lax.broadcasted_iota(jnp.int32, logits.shape, 1)
        logits = jnp.where(col < output_dim, logits, -1e30)
        m = jnp.max(logits, axis=1, keepdims=True)
        shifted = logits - m
        lse = jnp.log(jnp.sum(jnp.exp(shifted), axis=1, keepdims=True))
        out_ref[...] = shifted - lse


def _tiled_gcn_call(kernel, a_p, h_p, wb, out_cols, out_dtype, tm, tk,
                    transcendentals=0):
    """Shared pallas_call builder for the tiled aggregation kernels."""
    n_pad = a_p.shape[0]
    f_in = h_p.shape[1]
    grid = (n_pad // tm, n_pad // tk)

    weight_specs = [
        pl.BlockSpec(arr.shape, lambda i, k: (0, 0))   # resident across the grid
        for arr in wb
    ]

    flops = 2 * n_pad * n_pad * f_in
    for arr in wb:
        if arr.shape[0] > 1:                           # weight matrices, not biases
            flops += 2 * n_pad * arr.shape[0] * arr.shape[1]
    bytes_accessed = (a_p.size * a_p.dtype.itemsize
                      + h_p.size * h_p.dtype.itemsize
                      + sum(arr.size * arr.dtype.itemsize for arr in wb)
                      + n_pad * out_cols * jnp.dtype(out_dtype).itemsize)

    return pl.pallas_call(
        kernel,
        out_shape=jax.ShapeDtypeStruct((n_pad, out_cols), out_dtype),
        grid_spec=pltpu.PrefetchScalarGridSpec(
            num_scalar_prefetch=0,
            grid=grid,
            in_specs=[
                pl.BlockSpec((tm, tk), lambda i, k: (i, k)),    # A row/col tile
                pl.BlockSpec((tk, f_in), lambda i, k: (k, 0)),  # H column block
            ] + weight_specs,
            out_specs=pl.BlockSpec((tm, out_cols), lambda i, k: (i, 0)),
            scratch_shapes=[pltpu.VMEM((tm, f_in), jnp.float32)],
        ),
        compiler_params=pltpu.CompilerParams(
            dimension_semantics=("parallel", "arbitrary"),
            vmem_limit_bytes=_VMEM_LIMIT),
        cost_estimate=pl.CostEstimate(
            flops=flops,
            transcendentals=transcendentals,
            bytes_accessed=bytes_accessed),
    )(a_p, h_p, *wb)


@functools.partial(jax.jit, static_argnames=("output_dim",))
def gnn_forward(a_hat, x, params, *, output_dim):
    """Inference-mode GNN forward (dropout = identity). Returns [N, output_dim]."""
    n, f_in = x.shape
    w0, b0, w1, b1, w2, b2, wf, bf = params

    n_pad = _round_up(n, _LANE)
    # Prefer 256-wide tiles (v6e/v7x 256x256 MXU) when they divide evenly.
    tm = tk = 256 if n_pad % 256 == 0 else _LANE

    f_in_p = _round_up(f_in, _LANE)
    h0_p = _round_up(w0.shape[1], _LANE)
    h1_p = _round_up(w1.shape[1], _LANE)
    h2_p = _round_up(w2.shape[1], _LANE)
    out_p = _round_up(output_dim, _LANE)

    def pad(arr, rows, cols, dtype):
        return jnp.pad(arr.astype(dtype),
                       ((0, rows - arr.shape[0]), (0, cols - arr.shape[1])))

    # Adjacency / activations stream as bf16; weights/biases are tiny, stay f32.
    a_p = pad(a_hat, n_pad, n_pad, jnp.bfloat16)
    h = pad(x, n_pad, f_in_p, jnp.bfloat16)

    w0_p, b0_p = pad(w0, f_in_p, h0_p, jnp.float32), pad(b0, 1, h0_p, jnp.float32)
    w1_p, b1_p = pad(w1, h0_p, h1_p, jnp.float32), pad(b1, 1, h1_p, jnp.float32)
    w2_p, b2_p = pad(w2, h1_p, h2_p, jnp.float32), pad(b2, 1, h2_p, jnp.float32)
    wf_p, bf_p = pad(wf, h2_p, out_p, jnp.float32), pad(bf, 1, out_p, jnp.float32)

    # conv0 -> relu -> (dropout)   ;   conv1 -> relu -> (dropout)
    h = _tiled_gcn_call(_gcn_layer_kernel, a_p, h, (w0_p, b0_p),
                        h0_p, jnp.bfloat16, tm, tk)
    h = _tiled_gcn_call(_gcn_layer_kernel, a_p, h, (w1_p, b1_p),
                        h1_p, jnp.bfloat16, tm, tk)
    # conv2 -> relu -> (dropout) -> fc -> log_softmax, fused in one kernel.
    out_pad = _tiled_gcn_call(
        functools.partial(_gcn_final_kernel, output_dim),
        a_p, h, (w2_p, b2_p, wf_p, bf_p),
        out_p, jnp.float32, tm, tk,
        transcendentals=n_pad * out_p)

    return out_pad[:n, :output_dim]


def build_normalized_adjacency(edge_index, num_nodes):
    """Dense D^{-1/2} (A + I) D^{-1/2}, matching GCNConv's default gcn_norm.

    Self-loops are only added where missing (add_remaining_self_loops semantics),
    so an edge_index that already contains (i, i) does not get a diagonal of 2.
    """
    src, dst = edge_index[0], edge_index[1]
    a = jnp.zeros((num_nodes, num_nodes), jnp.float32)
    # message flows src -> dst; aggregation at dst  =>  A[dst, src] = 1
    a = a.at[dst, src].set(1.0)
    a = jnp.maximum(a, jnp.eye(num_nodes, dtype=jnp.float32))   # missing self loops
    deg = jnp.sum(a, axis=1)
    d_inv_sqrt = jnp.where(deg > 0, 1.0 / jnp.sqrt(deg), 0.0)
    return d_inv_sqrt[:, None] * a * d_inv_sqrt[None, :]


def init_params(key, input_dim, h0, h1, h2, output_dim):
    """Glorot-uniform-ish init. Biases kept 2D [1, F] for TPU layout."""
    dims = [(input_dim, h0), (h0, h1), (h1, h2), (h2, output_dim)]
    params = []
    for fan_in, fan_out in dims:
        kw, key = jax.random.split(key)
        limit = jnp.sqrt(6.0 / (fan_in + fan_out))
        w = jax.random.uniform(kw, (fan_in, fan_out), jnp.float32, -limit, limit)
        b = jnp.zeros((1, fan_out), jnp.float32)
        params += [w, b]
    return tuple(params)


def gnn_reference(a_hat, x, params):
    """Pure-JAX f32 reference (eval mode: dropout = identity)."""
    w0, b0, w1, b1, w2, b2, wf, bf = params
    h = x
    for w, b in ((w0, b0), (w1, b1), (w2, b2)):
        h = jnp.maximum(a_hat @ (h @ w) + b, 0.0)
    logits = h @ wf + bf
    return jax.nn.log_softmax(logits, axis=1)


if __name__ == "__main__":
    key = jax.random.PRNGKey(0)

    def run_case(n_nodes, dims, case_key):
        input_dim, h0, h1, h2, out_dim = dims
        kx, kp = jax.random.split(case_key)
        x = jax.random.normal(kx, (n_nodes, input_dim), jnp.float32)

        # Simple undirected ring graph as edge_index, shape (2, E).
        src = jnp.arange(n_nodes, dtype=jnp.int32)
        dst = (src + 1) % n_nodes
        edge_index = jnp.stack(
            [jnp.concatenate([src, dst]), jnp.concatenate([dst, src])], axis=0)

        a_hat = build_normalized_adjacency(edge_index, n_nodes)
        params = init_params(kp, input_dim, h0, h1, h2, out_dim)

        out = gnn_forward(a_hat, x, params, output_dim=out_dim)
        jax.block_until_ready(out)

        assert out.shape == (n_nodes, out_dim)
        row_sums = jnp.sum(jnp.exp(out), axis=1)
        assert bool(jnp.all(jnp.abs(row_sums - 1.0) < 1e-3)), "rows not normalized"

        ref = gnn_reference(a_hat, x, params)
        max_err = float(jnp.max(jnp.abs(out - ref)))
        assert max_err < 0.2, f"mismatch vs f32 reference: {max_err}"

    k1, k2 = jax.random.split(key)
    # Small case: N=16 -> padded to a single 128x128 tile.
    run_case(16, (8, 32, 32, 32, 4), k1)
    # Larger case exercising the (row, k) tiled grid: N=300 -> 3x3 grid of 128 tiles.
    run_case(300, (8, 32, 32, 32, 4), k2)

    print("KERNEL_OK")
</pallas_src>

<mosaic_0001>
module attributes {stable_mosaic.version = 11 : i64} {
  func.func @_gcn_layer_kernel(%arg0: i32, %arg1: i32, %arg2: memref<128x128xbf16, #tpu.memory_space<vmem>>, %arg3: memref<128x128xbf16, #tpu.memory_space<vmem>>, %arg4: memref<128x128xf32, #tpu.memory_space<vmem>>, %arg5: memref<1x128xf32, #tpu.memory_space<vmem>>, %arg6: memref<128x128xbf16, #tpu.memory_space<vmem>>, %arg7: memref<128x128xf32, #tpu.memory_space<vmem>>) attributes {dimension_semantics = [#tpu.dimension_semantics<parallel>, #tpu.dimension_semantics<arbitrary>], iteration_bounds = array<i64: 1, 1>, scalar_prefetch = 0 : i64, scratch_operands = 1 : i64, tpu.core_type = #tpu.core_type<tc>, window_params = [{transform_indices = @transform_0, window_bounds = array<i64: 128, 128>}, {transform_indices = @transform_1, window_bounds = array<i64: 128, 128>}, {pipeline_mode = #tpu.pipeline_mode<synchronous>, transform_indices = @transform_2, window_bounds = array<i64: 128, 128>}, {pipeline_mode = #tpu.pipeline_mode<synchronous>, transform_indices = @transform_3, window_bounds = array<i64: 1, 128>}, {transform_indices = @transform_4, window_bounds = array<i64: 128, 128>}]} {
    %c0_i32 = arith.constant 0 : i32
    %0 = arith.cmpi eq, %arg1, %c0_i32 : i32
    %1 = arith.extui %0 : i1 to i32
    %c0_i32_0 = arith.constant 0 : i32
    %2 = arith.cmpi ne, %1, %c0_i32_0 : i32
    scf.if %2 {
      %cst_10 = arith.constant 0.000000e+00 : f32
      %12 = vector.broadcast %cst_10 : f32 to vector<128x128xf32>
      %c0_11 = arith.constant 0 : index
      %c0_12 = arith.constant 0 : index
      %13 = vector.load %arg7[%c0_11, %c0_12] : memref<128x128xf32, #tpu.memory_space<vmem>>, vector<128x128xf32>
      tpu.vector_store %arg7[%c0_11, %c0_12], %12 {strides = array<i32>} : memref<128x128xf32, #tpu.memory_space<vmem>>, vector<128x128xf32>,
    } else {
    }
    %c0 = arith.constant 0 : index
    %c0_1 = arith.constant 0 : index
    %3 = vector.load %arg7[%c0, %c0_1] : memref<128x128xf32, #tpu.memory_space<vmem>>, vector<128x128xf32>
    %c0_2 = arith.constant 0 : index
    %c0_3 = arith.constant 0 : index
    %4 = vector.load %arg2[%c0_2, %c0_3] : memref<128x128xbf16, #tpu.memory_space<vmem>>, vector<128x128xbf16>
    %c0_4 = arith.constant 0 : index
    %c0_5 = arith.constant 0 : index
    %5 = vector.load %arg3[%c0_4, %c0_5] : memref<128x128xbf16, #tpu.memory_space<vmem>>, vector<128x128xbf16>
    %cst = arith.constant dense<0.000000e+00> : vector<128x128xf32>
    %6 = tpu.matmul %4, %5, %cst {dimension_numbers = #tpu.dot_dimension_numbers<[1], [0], [0], [1], [0, 0, 1, 1], [], []>} : vector<128x128xbf16>, vector<128x128xbf16>, vector<128x128xf32> -> vector<128x128xf32>
    %7 = arith.addf %3, %6 : vector<128x128xf32>
    %c0_6 = arith.constant 0 : index
    %c0_7 = arith.constant 0 : index
    %8 = vector.load %arg7[%c0_6, %c0_7] : memref<128x128xf32, #tpu.memory_space<vmem>>, vector<128x128xf32>
    tpu.vector_store %arg7[%c0_6, %c0_7], %7 {strides = array<i32>} : memref<128x128xf32, #tpu.memory_space<vmem>>, vector<128x128xf32>,
    %c0_i32_8 = arith.constant 0 : i32
    %9 = arith.cmpi eq, %arg1, %c0_i32_8 : i32
    %10 = arith.extui %9 : i1 to i32
    %c0_i32_9 = arith.constant 0 : i32
    %11 = arith.cmpi ne, %10, %c0_i32_9 : i32
    scf.if %11 {
      %c0_10 = arith.constant 0 : index
      %c0_11 = arith.constant 0 : index
      %12 = vector.load %arg7[%c0_10, %c0_11] : memref<128x128xf32, #tpu.memory_space<vmem>>, vector<128x128xf32>
      %c0_12 = arith.constant 0 : index
      %c0_13 = arith.constant 0 : index
      %13 = vector.load %arg4[%c0_12, %c0_13] : memref<128x128xf32, #tpu.memory_space<vmem>>, vector<128x128xf32>
      %cst_14 = arith.constant dense<0.000000e+00> : vector<128x128xf32>
      %14 = tpu.matmul %12, %13, %cst_14 {dimension_numbers = #tpu.dot_dimension_numbers<[1], [0], [0], [1], [0, 0, 1, 1], [], []>} : vector<128x128xf32>, vector<128x128xf32>, vector<128x128xf32> -> vector<128x128xf32>
      %c0_15 = arith.constant 0 : index
      %c0_16 = arith.constant 0 : index
      %15 = vector.load %arg5[%c0_15, %c0_16] : memref<1x128xf32, #tpu.memory_space<vmem>>, vector<1x128xf32>
      %16 = vector.broadcast %15 : vector<1x128xf32> to vector<128x128xf32>
      %17 = arith.addf %14, %16 : vector<128x128xf32>
      %cst_17 = arith.constant 0.000000e+00 : f32
      %18 = vector.broadcast %cst_17 : f32 to vector<128x128xf32>
      %19 = arith.maximumf %17, %18 : vector<128x128xf32>
      %20 = arith.truncf %19 : vector<128x128xf32> to vector<128x128xbf16>
      %c0_18 = arith.constant 0 : index
      %c0_19 = arith.constant 0 : index
      %21 = vector.load %arg6[%c0_18, %c0_19] : memref<128x128xbf16, #tpu.memory_space<vmem>>, vector<128x128xbf16>
      tpu.vector_store %arg6[%c0_18, %c0_19], %20 {strides = array<i32>} : memref<128x128xbf16, #tpu.memory_space<vmem>>, vector<128x128xbf16>,
    } else {
    }
    return
  }
  func.func @transform_0(%arg0: i32, %arg1: i32) -> (i32, i32) {
    %c0_i32 = arith.constant 0 : i32
    return %arg0, %arg1 : i32, i32
  }
  func.func @transform_1(%arg0: i32, %arg1: i32) -> (i32, i32) {
    %c0_i32 = arith.constant 0 : i32
    %c0_i32_0 = arith.constant 0 : i32
    return %arg1, %c0_i32 : i32, i32
  }
  func.func @transform_2(%arg0: i32, %arg1: i32) -> (i32, i32) {
    %c0_i32 = arith.constant 0 : i32
    %c0_i32_0 = arith.constant 0 : i32
    %c0_i32_1 = arith.constant 0 : i32
    return %c0_i32, %c0_i32_0 : i32, i32
  }
  func.func @transform_3(%arg0: i32, %arg1: i32) -> (i32, i32) {
    %c0_i32 = arith.constant 0 : i32
    %c0_i32_0 = arith.constant 0 : i32
    %c0_i32_1 = arith.constant 0 : i32
    return %c0_i32, %c0_i32_0 : i32, i32
  }
  func.func @transform_4(%arg0: i32, %arg1: i32) -> (i32, i32) {
    %c0_i32 = arith.constant 0 : i32
    %c0_i32_0 = arith.constant 0 : i32
    return %arg0, %c0_i32 : i32, i32
  }
}

module attributes {stable_mosaic.version = 11 : i64} {
  func.func @_gcn_final_kernel(%arg0: i32, %arg1: i32, %arg2: memref<128x128xbf16, #tpu.memory_space<vmem>>, %arg3: memref<128x128xbf16, #tpu.memory_space<vmem>>, %arg4: memref<128x128xf32, #tpu.memory_space<vmem>>, %arg5: memref<1x128xf32, #tpu.memory_space<vmem>>, %arg6: memref<128x128xf32, #tpu.memory_space<vmem>>, %arg7: memref<1x128xf32, #tpu.memory_space<vmem>>, %arg8: memref<128x128xf32, #tpu.memory_space<vmem>>, %arg9: memref<128x128xf32, #tpu.memory_space<vmem>>) attributes {dimension_semantics = [#tpu.dimension_semantics<parallel>, #tpu.dimension_semantics<arbitrary>], iteration_bounds = array<i64: 1, 1>, scalar_prefetch = 0 : i64, scratch_operands = 1 : i64, tpu.core_type = #tpu.core_type<tc>, window_params = [{transform_indices = @transform_0, window_bounds = array<i64: 128, 128>}, {transform_indices = @transform_1, window_bounds = array<i64: 128, 128>}, {pipeline_mode = #tpu.pipeline_mode<synchronous>, transform_indices = @transform_2, window_bounds = array<i64: 128, 128>}, {pipeline_mode = #tpu.pipeline_mode<synchronous>, transform_indices = @transform_3, window_bounds = array<i64: 1, 128>}, {pipeline_mode = #tpu.pipeline_mode<synchronous>, transform_indices = @transform_4, window_bounds = array<i64: 128, 128>}, {pipeline_mode = #tpu.pipeline_mode<synchronous>, transform_indices = @transform_5, window_bounds = array<i64: 1, 128>}, {transform_indices = @transform_6, window_bounds = array<i64: 128, 128>}]} {
    %c0_i32 = arith.constant 0 : i32
    %0 = arith.cmpi eq, %arg1, %c0_i32 : i32
    %1 = arith.extui %0 : i1 to i32
    %c0_i32_0 = arith.constant 0 : i32
    %2 = arith.cmpi ne, %1, %c0_i32_0 : i32
    scf.if %2 {
      %cst_10 = arith.constant 0.000000e+00 : f32
      %12 = vector.broadcast %cst_10 : f32 to vector<128x128xf32>
      %c0_11 = arith.constant 0 : index
      %c0_12 = arith.constant 0 : index
      %13 = vector.load %arg9[%c0_11, %c0_12] : memref<128x128xf32, #tpu.memory_space<vmem>>, vector<128x128xf32>
      tpu.vector_store %arg9[%c0_11, %c0_12], %12 {strides = array<i32>} : memref<128x128xf32, #tpu.memory_space<vmem>>, vector<128x128xf32>,
    } else {
    }
    %c0 = arith.constant 0 : index
    %c0_1 = arith.constant 0 : index
    %3 = vector.load %arg9[%c0, %c0_1] : memref<128x128xf32, #tpu.memory_space<vmem>>, vector<128x128xf32>
    %c0_2 = arith.constant 0 : index
    %c0_3 = arith.constant 0 : index
    %4 = vector.load %arg2[%c0_2, %c0_3] : memref<128x128xbf16, #tpu.memory_space<vmem>>, vector<128x128xbf16>
    %c0_4 = arith.constant 0 : index
    %c0_5 = arith.constant 0 : index
    %5 = vector.load %arg3[%c0_4, %c0_5] : memref<128x128xbf16, #tpu.memory_space<vmem>>, vector<128x128xbf16>
    %cst = arith.constant dense<0.000000e+00> : vector<128x128xf32>
    %6 = tpu.matmul %4, %5, %cst {dimension_numbers = #tpu.dot_dimension_numbers<[1], [0], [0], [1], [0, 0, 1, 1], [], []>} : vector<128x128xbf16>, vector<128x128xbf16>, vector<128x128xf32> -> vector<128x128xf32>
    %7 = arith.addf %3, %6 : vector<128x128xf32>
    %c0_6 = arith.constant 0 : index
    %c0_7 = arith.constant 0 : index
    %8 = vector.load %arg9[%c0_6, %c0_7] : memref<128x128xf32, #tpu.memory_space<vmem>>, vector<128x128xf32>
    tpu.vector_store %arg9[%c0_6, %c0_7], %7 {strides = array<i32>} : memref<128x128xf32, #tpu.memory_space<vmem>>, vector<128x128xf32>,
    %c0_i32_8 = arith.constant 0 : i32
    %9 = arith.cmpi eq, %arg1, %c0_i32_8 : i32
    %10 = arith.extui %9 : i1 to i32
    %c0_i32_9 = arith.constant 0 : i32
    %11 = arith.cmpi ne, %10, %c0_i32_9 : i32
    scf.if %11 {
      %c0_10 = arith.constant 0 : index
      %c0_11 = arith.constant 0 : index
      %12 = vector.load %arg9[%c0_10, %c0_11] : memref<128x128xf32, #tpu.memory_space<vmem>>, vector<128x128xf32>
      %c0_12 = arith.constant 0 : index
      %c0_13 = arith.constant 0 : index
      %13 = vector.load %arg4[%c0_12, %c0_13] : memref<128x128xf32, #tpu.memory_space<vmem>>, vector<128x128xf32>
      %cst_14 = arith.constant dense<0.000000e+00> : vector<128x128xf32>
      %14 = tpu.matmul %12, %13, %cst_14 {dimension_numbers = #tpu.dot_dimension_numbers<[1], [0], [0], [1], [0, 0, 1, 1], [], []>} : vector<128x128xf32>, vector<128x128xf32>, vector<128x128xf32> -> vector<128x128xf32>
      %c0_15 = arith.constant 0 : index
      %c0_16 = arith.constant 0 : index
      %15 = vector.load %arg5[%c0_15, %c0_16] : memref<1x128xf32, #tpu.memory_space<vmem>>, vector<1x128xf32>
      %16 = vector.broadcast %15 : vector<1x128xf32> to vector<128x128xf32>
      %17 = arith.addf %14, %16 : vector<128x128xf32>
      %cst_17 = arith.constant 0.000000e+00 : f32
      %18 = vector.broadcast %cst_17 : f32 to vector<128x128xf32>
      %19 = arith.maximumf %17, %18 : vector<128x128xf32>
      %c0_18 = arith.constant 0 : index
      %c0_19 = arith.constant 0 : index
      %20 = vector.load %arg6[%c0_18, %c0_19] : memref<128x128xf32, #tpu.memory_space<vmem>>, vector<128x128xf32>
      %cst_20 = arith.constant dense<0.000000e+00> : vector<128x128xf32>
      %21 = tpu.matmul %19, %20, %cst_20 {dimension_numbers = #tpu.dot_dimension_numbers<[1], [0], [0], [1], [0, 0, 1, 1], [], []>} : vector<128x128xf32>, vector<128x128xf32>, vector<128x128xf32> -> vector<128x128xf32>
      %c0_21 = arith.constant 0 : index
      %c0_22 = arith.constant 0 : index
      %22 = vector.load %arg7[%c0_21, %c0_22] : memref<1x128xf32, #tpu.memory_space<vmem>>, vector<1x128xf32>
      %23 = vector.broadcast %22 : vector<1x128xf32> to vector<128x128xf32>
      %24 = arith.addf %21, %23 : vector<128x128xf32>
      %25 = tpu.iota {dimensions = array<i32: 1>} : vector<128x128xi32>
      %c4_i32 = arith.constant 4 : i32
      %26 = vector.broadcast %c4_i32 : i32 to vector<128x128xi32>
      %27 = arith.cmpi slt, %25, %26 : vector<128x128xi32>
      %cst_23 = arith.constant -1.000000e+30 : f32
      %28 = vector.broadcast %cst_23 : f32 to vector<128x128xf32>
      %29 = arith.select %27, %24, %28 : vector<128x128xi1>, vector<128x128xf32>
      %cst_24 = arith.constant dense<0xFF800000> : vector<128xf32>
      %30 = vector.multi_reduction <maximumf>, %29, %cst_24 [1] : vector<128x128xf32> to vector<128xf32>
      %31 = vector.shape_cast %30 : vector<128xf32> to vector<128x1xf32>
      %32 = vector.broadcast %31 : vector<128x1xf32> to vector<128x128xf32>
      %33 = arith.subf %29, %32 : vector<128x128xf32>
      %34 = math.exp %33 : vector<128x128xf32>
      %cst_25 = arith.constant dense<0.000000e+00> : vector<128xf32>
      %35 = vector.multi_reduction <add>, %34, %cst_25 [1] : vector<128x128xf32> to vector<128xf32>
      %36 = vector.shape_cast %35 : vector<128xf32> to vector<128x1xf32>
      %37 = math.log %36 : vector<128x1xf32>
      %38 = vector.broadcast %37 : vector<128x1xf32> to vector<128x128xf32>
      %39 = arith.subf %33, %38 : vector<128x128xf32>
      %c0_26 = arith.constant 0 : index
      %c0_27 = arith.constant 0 : index
      %40 = vector.load %arg8[%c0_26, %c0_27] : memref<128x128xf32, #tpu.memory_space<vmem>>, vector<128x128xf32>
      tpu.vector_store %arg8[%c0_26, %c0_27], %39 {strides = array<i32>} : memref<128x128xf32, #tpu.memory_space<vmem>>, vector<128x128xf32>,
    } else {
    }
    return
  }
  func.func @transform_0(%arg0: i32, %arg1: i32) -> (i32, i32) {
    %c0_i32 = arith.constant 0 : i32
    return %arg0, %arg1 : i32, i32
  }
  func.func @transform_1(%arg0: i32, %arg1: i32) -> (i32, i32) {
    %c0_i32 = arith.constant 0 : i32
    %c0_i32_0 = arith.constant 0 : i32
    return %arg1, %c0_i32 : i32, i32
  }
  func.func @transform_2(%arg0: i32, %arg1: i32) -> (i32, i32) {
    %c0_i32 = arith.constant 0 : i32
    %c0_i32_0 = arith.constant 0 : i32
    %c0_i32_1 = arith.constant 0 : i32
    return %c0_i32, %c0_i32_0 : i32, i32
  }
  func.func @transform_3(%arg0: i32, %arg1: i32) -> (i32, i32) {
    %c0_i32 = arith.constant 0 : i32
    %c0_i32_0 = arith.constant 0 : i32
    %c0_i32_1 = arith.constant 0 : i32
    return %c0_i32, %c0_i32_0 : i32, i32
  }
  func.func @transform_4(%arg0: i32, %arg1: i32) -> (i32, i32) {
    %c0_i32 = arith.constant 0 : i32
    %c0_i32_0 = arith.constant 0 : i32
    %c0_i32_1 = arith.constant 0 : i32
    return %c0_i32, %c0_i32_0 : i32, i32
  }
  func.func @transform_5(%arg0: i32, %arg1: i32) -> (i32, i32) {
    %c0_i32 = arith.constant 0 : i32
    %c0_i32_0 = arith.constant 0 : i32
    %c0_i32_1 = arith.constant 0 : i32
    return %c0_i32, %c0_i32_0 : i32, i32
  }
  func.func @transform_6(%arg0: i32, %arg1: i32) -> (i32, i32) {
    %c0_i32 = arith.constant 0 : i32
    %c0_i32_0 = arith.constant 0 : i32
    return %arg0, %c0_i32 : i32, i32
  }
}

</mosaic_0001>

<llo_original>
// kernel: gnn_forward.3
$region0: #{gnn_forward.3}
  #allocation0 [shape = 'u32[]', space=smem, size = 0x4, offset = 0x4, fixed_abs, tag = 'smem constant byte address 0x4 - core index']
  #allocation1 [shape = 'u32[72,128]{1,0:T(1,128)}', space=vmem, size = 0x9000, scoped, tag = 'internal scratch']
  #allocation2 [shape = 'f32[128,128]{1,0:T(8,128)}', space=vmem, size = 0x10000, scoped, tag = 'scratch operand']
  %s0 = inlined_call_operand.vmem [shape: bf16[128,128], index: 0, kind: input, shape index: {}]
  %s1 = inlined_call_operand.vmem [shape: bf16[128,128], index: 1, kind: input, shape index: {}]
  %s2 = inlined_call_operand.vmem [shape: f32[128,128], index: 2, kind: input, shape index: {}]
  %s3 = inlined_call_operand.vmem [shape: f32[1,128], index: 3, kind: input, shape index: {}]
  %s4 = inlined_call_operand.vmem [shape: bf16[128,128], index: 4, kind: output, shape index: {}]
  %s5 = sld [smem:[#allocation0]]
  $region34: #{gnn_forward.3} parent=0
    _
  %s7 = ssub.s32 1, %s5
  %s8 = scalar_select 0, %s7, %s5
  // Predicated region
  $region2: #{gnn_forward.3} parent=0 // pred_check
    _
  $region3: #{gnn_forward.3} parent=0 // pred_check_branch
    %10 = sbr.rel (0) target = $region5
  $region4: #{gnn_forward.3} parent=0 // pred_region
    _
  $region5: #{gnn_forward.3} parent=0 // pred_fallthru
    _
  // Predicated region
  $region6: #{gnn_forward.3} parent=0 // pred_check
    _
  $region7: #{gnn_forward.3} parent=0 // pred_check_branch
    %12 = sbr.rel (0) target = $region9
  $region8: #{gnn_forward.3} parent=0 // pred_region
    _
  $region9: #{gnn_forward.3} parent=0 // pred_fallthru
    _
  // Predicated region
  $region10: #{gnn_forward.3} parent=0 // pred_check
    _
  $region11: #{gnn_forward.3} parent=0 // pred_check_branch
    %14 = sbr.rel (0) target = $region13
  $region12: #{gnn_forward.3} parent=0 // pred_region
    _
  $region13: #{gnn_forward.3} parent=0 // pred_fallthru
    _
  // Predicated region
  $region14: #{gnn_forward.3} parent=0 // pred_check
    _
  $region15: #{gnn_forward.3} parent=0 // pred_check_branch
    %16 = sbr.rel (0) target = $region17
  $region16: #{gnn_forward.3} parent=0 // pred_region
    _
  $region17: #{gnn_forward.3} parent=0 // pred_fallthru
    _
  %p17 = scmp.eq.s32.totalorder 0, 0
  // Predicated region
  $region18: #{gnn_forward.3} parent=0 // pred_check
    %p18 = pneg %p17
  $region19: #{gnn_forward.3} parent=0 // pred_check_branch
    %20 = sbr.rel (%p18) target = $region21
  $region20: #{gnn_forward.3} parent=0 // pred_region
    %21 = vst [vmem:[#allocation2] sm:$0xff] 0.0
    %22 = vst [vmem:[#allocation2 + $0x8] sm:$0xff] 0.0
    %23 = vst [vmem:[#allocation2 + $0x10] sm:$0xff] 0.0
    %24 = vst [vmem:[#allocation2 + $0x18] sm:$0xff] 0.0
    %25 = vst [vmem:[#allocation2 + $0x20] sm:$0xff] 0.0
    %26 = vst [vmem:[#allocation2 + $0x28] sm:$0xff] 0.0
    %27 = vst [vmem:[#allocation2 + $0x30] sm:$0xff] 0.0
    %28 = vst [vmem:[#allocation2 + $0x38] sm:$0xff] 0.0
    %29 = vst [vmem:[#allocation2 + $0x40] sm:$0xff] 0.0
    %30 = vst [vmem:[#allocation2 + $0x48] sm:$0xff] 0.0
    %31 = vst [vmem:[#allocation2 + $0x50] sm:$0xff] 0.0
    %32 = vst [vmem:[#allocation2 + $0x58] sm:$0xff] 0.0
    %33 = vst [vmem:[#allocation2 + $0x60] sm:$0xff] 0.0
    %34 = vst [vmem:[#allocation2 + $0x68] sm:$0xff] 0.0
    %35 = vst [vmem:[#allocation2 + $0x70] sm:$0xff] 0.0
    %36 = vst [vmem:[#allocation2 + $0x78] sm:$0xff] 0.0
  $region21: #{gnn_forward.3} parent=0 // pred_fallthru
    _
  %v37 = vld [vmem:[#allocation2] sm:$0xff]
  %v38 = vld [vmem:[#allocation2 + $0x8] sm:$0xff]
  %v39 = vld [vmem:[#allocation2 + $0x10] sm:$0xff]
  %v40 = vld [vmem:[#allocation2 + $0x18] sm:$0xff]
  %v41 = vld [vmem:[#allocation2 + $0x20] sm:$0xff]
  %v42 = vld [vmem:[#allocation2 + $0x28] sm:$0xff]
  %v43 = vld [vmem:[#allocation2 + $0x30] sm:$0xff]
  %v44 = vld [vmem:[#allocation2 + $0x38] sm:$0xff]
  %v45 = vld [vmem:[#allocation2 + $0x40] sm:$0xff]
  %v46 = vld [vmem:[#allocation2 + $0x48] sm:$0xff]
  %v47 = vld [vmem:[#allocation2 + $0x50] sm:$0xff]
  %v48 = vld [vmem:[#allocation2 + $0x58] sm:$0xff]
  %v49 = vld [vmem:[#allocation2 + $0x60] sm:$0xff]
  %v50 = vld [vmem:[#allocation2 + $0x68] sm:$0xff]
  %v51 = vld [vmem:[#allocation2 + $0x70] sm:$0xff]
  %v52 = vld [vmem:[#allocation2 + $0x78] sm:$0xff]
  %v53 = vld [vmem:[%s0] sm:$0xf]
  %v54 = vld [vmem:[%s0 + $0x4] sm:$0xf]
  %v55 = vld [vmem:[%s0 + $0x8] sm:$0xf]
  %v56 = vld [vmem:[%s0 + $0xc] sm:$0xf]
  %v57 = vld [vmem:[%s0 + $0x10] sm:$0xf]
  %v58 = vld [vmem:[%s0 + $0x14] sm:$0xf]
  %v59 = vld [vmem:[%s0 + $0x18] sm:$0xf]
  %v60 = vld [vmem:[%s0 + $0x1c] sm:$0xf]
  %v61 = vld [vmem:[%s0 + $0x20] sm:$0xf]
  %v62 = vld [vmem:[%s0 + $0x24] sm:$0xf]
  %v63 = vld [vmem:[%s0 + $0x28] sm:$0xf]
  %v64 = vld [vmem:[%s0 + $0x2c] sm:$0xf]
  %v65 = vld [vmem:[%s0 + $0x30] sm:$0xf]
  %v66 = vld [vmem:[%s0 + $0x34] sm:$0xf]
  %v67 = vld [vmem:[%s0 + $0x38] sm:$0xf]
  %v68 = vld [vmem:[%s0 + $0x3c] sm:$0xf]
  %v69 = vld [vmem:[%s1] sm:$0xf]
  %v70 = vld [vmem:[%s1 + $0x4] sm:$0xf]
  %v71 = vld [vmem:[%s1 + $0x8] sm:$0xf]
  %v72 = vld [vmem:[%s1 + $0xc] sm:$0xf]
  %v73 = vld [vmem:[%s1 + $0x10] sm:$0xf]
  %v74 = vld [vmem:[%s1 + $0x14] sm:$0xf]
  %v75 = vld [vmem:[%s1 + $0x18] sm:$0xf]
  %v76 = vld [vmem:[%s1 + $0x1c] sm:$0xf]
  %v77 = vld [vmem:[%s1 + $0x20] sm:$0xf]
  %v78 = vld [vmem:[%s1 + $0x24] sm:$0xf]
  %v79 = vld [vmem:[%s1 + $0x28] sm:$0xf]
  %v80 = vld [vmem:[%s1 + $0x2c] sm:$0xf]
  %v81 = vld [vmem:[%s1 + $0x30] sm:$0xf]
  %v82 = vld [vmem:[%s1 + $0x34] sm:$0xf]
  %v83 = vld [vmem:[%s1 + $0x38] sm:$0xf]
  %v84 = vld [vmem:[%s1 + $0x3c] sm:$0xf]
  %v101 = vunpack.c.l.b16 %v53
  %v102 = vunpack.c.l.b16 %v54
  %v103 = vunpack.c.l.b16 %v55
  %v104 = vunpack.c.l.b16 %v56
  %v105 = vunpack.c.l.b16 %v57
  %v106 = vunpack.c.l.b16 %v58
  %v107 = vunpack.c.l.b16 %v59
  %v108 = vunpack.c.l.b16 %v60
  %v109 = vunpack.c.l.b16 %v61
  %v110 = vunpack.c.l.b16 %v62
  %v111 = vunpack.c.l.b16 %v63
  %v112 = vunpack.c.l.b16 %v64
  %v113 = vunpack.c.l.b16 %v65
  %v114 = vunpack.c.l.b16 %v66
  %v115 = vunpack.c.l.b16 %v67
  %v116 = vunpack.c.l.b16 %v68
  %v117 = vpack.c.b16 %v102, %v101
  %v118 = vpack.c.b16 %v104, %v103
  %v119 = vpack.c.b16 %v106, %v105
  %v120 = vpack.c.b16 %v108, %v107
  %v121 = vpack.c.b16 %v110, %v109
  %v122 = vpack.c.b16 %v112, %v111
  %v123 = vpack.c.b16 %v114, %v113
  %v124 = vpack.c.b16 %v116, %v115
  %v149 = vunpack.c.l.b16 %v69
  %v150 = vunpack.c.l.b16 %v70
  %v151 = vunpack.c.l.b16 %v71
  %v152 = vunpack.c.l.b16 %v72
  %v153 = vunpack.c.l.b16 %v73
  %v154 = vunpack.c.l.b16 %v74
  %v155 = vunpack.c.l.b16 %v75
  %v156 = vunpack.c.l.b16 %v76
  %v157 = vunpack.c.l.b16 %v77
  %v158 = vunpack.c.l.b16 %v78
  %v159 = vunpack.c.l.b16 %v79
  %v160 = vunpack.c.l.b16 %v80
  %v161 = vunpack.c.l.b16 %v81
  %v162 = vunpack.c.l.b16 %v82
  %v163 = vunpack.c.l.b16 %v83
  %v164 = vunpack.c.l.b16 %v84
  %v165 = vpack.c.b16 %v150, %v149
  %v166 = vpack.c.b16 %v152, %v151
  %v167 = vpack.c.b16 %v154, %v153
  %v168 = vpack.c.b16 %v156, %v155
  %v169 = vpack.c.b16 %v158, %v157
  %v170 = vpack.c.b16 %v160, %v159
  %v171 = vpack.c.b16 %v162, %v161
  %v172 = vpack.c.b16 %v164, %v163
  %181 = vmatpush.bf16.msra.mxu0 %v172
  %182 = vmatpush.bf16.msra.mxu0 %v171
  %183 = vmatpush.bf16.msra.mxu0 %v170
  %184 = vmatpush.bf16.msra.mxu0 %v169
  %185 = vmatpush.bf16.msra.mxu0 %v168
  %186 = vmatpush.bf16.msra.mxu0 %v167
  %187 = vmatpush.bf16.msra.mxu0 %v166
  %188 = vmatpush.bf16.msra.mxu0 %v165
  %189 = vmatmul.bf16.gmra.mxu0 %v117
  %v190 = vpop.f32.mrf.mxu0
  %v191 = vadd.f32 0.0, %v190
  %v192 = vpop.f32.mrf.mxu0
  %v193 = vadd.f32 0.0, %v192
  %194 = vmatmul.bf16.gmra.mxu0 %v118
  %v195 = vpop.f32.mrf.mxu0
  %v196 = vadd.f32 0.0, %v195
  %v197 = vpop.f32.mrf.mxu0
  %v198 = vadd.f32 0.0, %v197
  %199 = vmatmul.bf16.gmra.mxu0 %v119
  %v200 = vpop.f32.mrf.mxu0
  %v201 = vadd.f32 0.0, %v200
  %v202 = vpop.f32.mrf.mxu0
  %v203 = vadd.f32 0.0, %v202
  %204 = vmatmul.bf16.gmra.mxu0 %v120
  %v205 = vpop.f32.mrf.mxu0
  %v206 = vadd.f32 0.0, %v205
  %v207 = vpop.f32.mrf.mxu0
  %v208 = vadd.f32 0.0, %v207
  %209 = vmatmul.bf16.gmra.mxu0 %v121
  %v210 = vpop.f32.mrf.mxu0
  %v211 = vadd.f32 0.0, %v210
  %v212 = vpop.f32.mrf.mxu0
  %v213 = vadd.f32 0.0, %v212
  %214 = vmatmul.bf16.gmra.mxu0 %v122
  %v215 = vpop.f32.mrf.mxu0
  %v216 = vadd.f32 0.0, %v215
  %v217 = vpop.f32.mrf.mxu0
  %v218 = vadd.f32 0.0, %v217
  %219 = vmatmul.bf16.gmra.mxu0 %v123
  %v220 = vpop.f32.mrf.mxu0
  %v221 = vadd.f32 0.0, %v220
  %v222 = vpop.f32.mrf.mxu0
  %v223 = vadd.f32 0.0, %v222
  %224 = vmatmul.bf16.gmra.mxu0 %v124
  %v225 = vpop.f32.mrf.mxu0
  %v226 = vadd.f32 0.0, %v225
  %v227 = vpop.f32.mrf.mxu0
  %v228 = vadd.f32 0.0, %v227
  %229 = vdwg.mxu0
  %v230 = vadd.f32 %v37, %v191
  %v231 = vadd.f32 %v38, %v193
  %v232 = vadd.f32 %v39, %v196
  %v233 = vadd.f32 %v40, %v198
  %v234 = vadd.f32 %v41, %v201
  %v235 = vadd.f32 %v42, %v203
  %v236 = vadd.f32 %v43, %v206
  %v237 = vadd.f32 %v44, %v208
  %v238 = vadd.f32 %v45, %v211
  %v239 = vadd.f32 %v46, %v213
  %v240 = vadd.f32 %v47, %v216
  %v241 = vadd.f32 %v48, %v218
  %v242 = vadd.f32 %v49, %v221
  %v243 = vadd.f32 %v50, %v223
  %v244 = vadd.f32 %v51, %v226
  %v245 = vadd.f32 %v52, %v228
  %246 = vst [vmem:[#allocation2] sm:$0xff] %v230
  %247 = vst [vmem:[#allocation2 + $0x8] sm:$0xff] %v231
  %248 = vst [vmem:[#allocation2 + $0x10] sm:$0xff] %v232
  %249 = vst [vmem:[#allocation2 + $0x18] sm:$0xff] %v233
  %250 = vst [vmem:[#allocation2 + $0x20] sm:$0xff] %v234
  %251 = vst [vmem:[#allocation2 + $0x28] sm:$0xff] %v235
  %252 = vst [vmem:[#allocation2 + $0x30] sm:$0xff] %v236
  %253 = vst [vmem:[#allocation2 + $0x38] sm:$0xff] %v237
  %254 = vst [vmem:[#allocation2 + $0x40] sm:$0xff] %v238
  %255 = vst [vmem:[#allocation2 + $0x48] sm:$0xff] %v239
  %256 = vst [vmem:[#allocation2 + $0x50] sm:$0xff] %v240
  %257 = vst [vmem:[#allocation2 + $0x58] sm:$0xff] %v241
  %258 = vst [vmem:[#allocation2 + $0x60] sm:$0xff] %v242
  %259 = vst [vmem:[#allocation2 + $0x68] sm:$0xff] %v243
  %260 = vst [vmem:[#allocation2 + $0x70] sm:$0xff] %v244
  %261 = vst [vmem:[#allocation2 + $0x78] sm:$0xff] %v245
  // Predicated region
  $region22: #{gnn_forward.3} parent=0 // pred_check
    %p262 = pneg %p17
  $region23: #{gnn_forward.3} parent=0 // pred_check_branch
    %264 = sbr.rel (%p262) target = $region25
  $region24: #{gnn_forward.3} parent=0 // pred_region
    %v265 = vld [vmem:[#allocation2] sm:$0xff]
    %v266 = vld [vmem:[#allocation2 + $0x8] sm:$0xff]
    %v267 = vld [vmem:[#allocation2 + $0x10] sm:$0xff]
    %v268 = vld [vmem:[#allocation2 + $0x18] sm:$0xff]
    %v269 = vld [vmem:[#allocation2 + $0x20] sm:$0xff]
    %v270 = vld [vmem:[#allocation2 + $0x28] sm:$0xff]
    %v271 = vld [vmem:[#allocation2 + $0x30] sm:$0xff]
    %v272 = vld [vmem:[#allocation2 + $0x38] sm:$0xff]
    %v273 = vld [vmem:[#allocation2 + $0x40] sm:$0xff]
    %v274 = vld [vmem:[#allocation2 + $0x48] sm:$0xff]
    %v275 = vld [vmem:[#allocation2 + $0x50] sm:$0xff]
    %v276 = vld [vmem:[#allocation2 + $0x58] sm:$0xff]
    %v277 = vld [vmem:[#allocation2 + $0x60] sm:$0xff]
    %v278 = vld [vmem:[#allocation2 + $0x68] sm:$0xff]
    %v279 = vld [vmem:[#allocation2 + $0x70] sm:$0xff]
    %v280 = vld [vmem:[#allocation2 + $0x78] sm:$0xff]
    %v281 = vld [vmem:[%s2] sm:$0xff]
    %v282 = vld [vmem:[%s2 + $0x8] sm:$0xff]
    %v283 = vld [vmem:[%s2 + $0x10] sm:$0xff]
    %v284 = vld [vmem:[%s2 + $0x18] sm:$0xff]
    %v285 = vld [vmem:[%s2 + $0x20] sm:$0xff]
    %v286 = vld [vmem:[%s2 + $0x28] sm:$0xff]
    %v287 = vld [vmem:[%s2 + $0x30] sm:$0xff]
    %v288 = vld [vmem:[%s2 + $0x38] sm:$0xff]
    %v289 = vld [vmem:[%s2 + $0x40] sm:$0xff]
    %v290 = vld [vmem:[%s2 + $0x48] sm:$0xff]
    %v291 = vld [vmem:[%s2 + $0x50] sm:$0xff]
    %v292 = vld [vmem:[%s2 + $0x58] sm:$0xff]
    %v293 = vld [vmem:[%s2 + $0x60] sm:$0xff]
    %v294 = vld [vmem:[%s2 + $0x68] sm:$0xff]
    %v295 = vld [vmem:[%s2 + $0x70] sm:$0xff]
    %v296 = vld [vmem:[%s2 + $0x78] sm:$0xff]
    %v297 = vld [vmem:[%s3] sm:$0x1]
    %v299 = vperm.slane %v297, 0
    %301 = vmatpush.msra.mxu0 %v296
    %302 = vmatpush.msra.mxu0 %v295
    %303 = vmatpush.msra.mxu0 %v294
    %304 = vmatpush.msra.mxu0 %v293
    %305 = vmatpush.msra.mxu0 %v292
    %306 = vmatpush.msra.mxu0 %v291
    %307 = vmatpush.msra.mxu0 %v290
    %308 = vmatpush.msra.mxu0 %v289
    %309 = vmatpush.msra.mxu0 %v288
    %310 = vmatpush.msra.mxu0 %v287
    %311 = vmatpush.msra.mxu0 %v286
    %312 = vmatpush.msra.mxu0 %v285
    %313 = vmatpush.msra.mxu0 %v284
    %314 = vmatpush.msra.mxu0 %v283
    %315 = vmatpush.msra.mxu0 %v282
    %316 = vmatpush.msra.mxu0 %v281
    %317 = vmatmul.f32.gmra.mxu0 %v265
    %v318 = vpop.f32.mrf.mxu0
    %v319 = vadd.f32 %v299, %v318
    %320 = vmatmul.f32.gmra.mxu0 %v266
    %v321 = vpop.f32.mrf.mxu0
    %v322 = vadd.f32 %v299, %v321
    %323 = vmatmul.f32.gmra.mxu0 %v267
    %v324 = vpop.f32.mrf.mxu0
    %v325 = vadd.f32 %v299, %v324
    %326 = vmatmul.f32.gmra.mxu0 %v268
    %v327 = vpop.f32.mrf.mxu0
    %v328 = vadd.f32 %v299, %v327
    %329 = vmatmul.f32.gmra.mxu0 %v269
    %v330 = vpop.f32.mrf.mxu0
    %v331 = vadd.f32 %v299, %v330
    %332 = vmatmul.f32.gmra.mxu0 %v270
    %v333 = vpop.f32.mrf.mxu0
    %v334 = vadd.f32 %v299, %v333
    %335 = vmatmul.f32.gmra.mxu0 %v271
    %v336 = vpop.f32.mrf.mxu0
    %v337 = vadd.f32 %v299, %v336
    %338 = vmatmul.f32.gmra.mxu0 %v272
    %v339 = vpop.f32.mrf.mxu0
    %v340 = vadd.f32 %v299, %v339
    %341 = vmatmul.f32.gmra.mxu0 %v273
    %v342 = vpop.f32.mrf.mxu0
    %v343 = vadd.f32 %v299, %v342
    %344 = vmatmul.f32.gmra.mxu0 %v274
    %v345 = vpop.f32.mrf.mxu0
    %v346 = vadd.f32 %v299, %v345
    %347 = vmatmul.f32.gmra.mxu0 %v275
    %v348 = vpop.f32.mrf.mxu0
    %v349 = vadd.f32 %v299, %v348
    %350 = vmatmul.f32.gmra.mxu0 %v276
    %v351 = vpop.f32.mrf.mxu0
    %v352 = vadd.f32 %v299, %v351
    %353 = vmatmul.f32.gmra.mxu0 %v277
    %v354 = vpop.f32.mrf.mxu0
    %v355 = vadd.f32 %v299, %v354
    %356 = vmatmul.f32.gmra.mxu0 %v278
    %v357 = vpop.f32.mrf.mxu0
    %v358 = vadd.f32 %v299, %v357
    %359 = vmatmul.f32.gmra.mxu0 %v279
    %v360 = vpop.f32.mrf.mxu0
    %v361 = vadd.f32 %v299, %v360
    %362 = vmatmul.f32.gmra.mxu0 %v280
    %v363 = vpop.f32.mrf.mxu0
    %v364 = vadd.f32 %v299, %v363
    %365 = vdwg.mxu0
    %v366 = vmax.f32 %v319, 0.0
    %v367 = vmax.f32 %v322, 0.0
    %v368 = vmax.f32 %v325, 0.0
    %v369 = vmax.f32 %v328, 0.0
    %v370 = vmax.f32 %v331, 0.0
    %v371 = vmax.f32 %v334, 0.0
    %v372 = vmax.f32 %v337, 0.0
    %v373 = vmax.f32 %v340, 0.0
    %v374 = vmax.f32 %v343, 0.0
    %v375 = vmax.f32 %v346, 0.0
    %v376 = vmax.f32 %v349, 0.0
    %v377 = vmax.f32 %v352, 0.0
    %v378 = vmax.f32 %v355, 0.0
    %v379 = vmax.f32 %v358, 0.0
    %v380 = vmax.f32 %v361, 0.0
    %v381 = vmax.f32 %v364, 0.0
    %v382 = vpack.c.bf16 %v366, %v366
    %v383 = vpack.c.bf16 %v367, %v367
    %v384 = vpack.c.bf16 %v368, %v368
    %v385 = vpack.c.bf16 %v369, %v369
    %v386 = vpack.c.bf16 %v370, %v370
    %v387 = vpack.c.bf16 %v371, %v371
    %v388 = vpack.c.bf16 %v372, %v372
    %v389 = vpack.c.bf16 %v373, %v373
    %v390 = vpack.c.bf16 %v374, %v374
    %v391 = vpack.c.bf16 %v375, %v375
    %v392 = vpack.c.bf16 %v376, %v376
    %v393 = vpack.c.bf16 %v377, %v377
    %v394 = vpack.c.bf16 %v378, %v378
    %v395 = vpack.c.bf16 %v379, %v379
    %v396 = vpack.c.bf16 %v380, %v380
    %v397 = vpack.c.bf16 %v381, %v381
    %398 = vst [vmem:[%s4] sm:$0xf] %v382
    %399 = vst [vmem:[%s4 + $0x4] sm:$0xf] %v383
    %400 = vst [vmem:[%s4 + $0x8] sm:$0xf] %v384
    %401 = vst [vmem:[%s4 + $0xc] sm:$0xf] %v385
    %402 = vst [vmem:[%s4 + $0x10] sm:$0xf] %v386
    %403 = vst [vmem:[%s4 + $0x14] sm:$0xf] %v387
    %404 = vst [vmem:[%s4 + $0x18] sm:$0xf] %v388
    %405 = vst [vmem:[%s4 + $0x1c] sm:$0xf] %v389
    %406 = vst [vmem:[%s4 + $0x20] sm:$0xf] %v390
    %407 = vst [vmem:[%s4 + $0x24] sm:$0xf] %v391
    %408 = vst [vmem:[%s4 + $0x28] sm:$0xf] %v392
    %409 = vst [vmem:[%s4 + $0x2c] sm:$0xf] %v393
    %410 = vst [vmem:[%s4 + $0x30] sm:$0xf] %v394
    %411 = vst [vmem:[%s4 + $0x34] sm:$0xf] %v395
    %412 = vst [vmem:[%s4 + $0x38] sm:$0xf] %v396
    %413 = vst [vmem:[%s4 + $0x3c] sm:$0xf] %v397
  $region25: #{gnn_forward.3} parent=0 // pred_fallthru
    _
  // Predicated region
  $region26: #{gnn_forward.3} parent=0 // pred_check
    _
  $region27: #{gnn_forward.3} parent=0 // pred_check_branch
    %415 = sbr.rel (0) target = $region29
  $region28: #{gnn_forward.3} parent=0 // pred_region
    _
  $region29: #{gnn_forward.3} parent=0 // pred_fallthru
    _
  // Predicated region
  $region30: #{gnn_forward.3} parent=0 // pred_check
    _
  $region31: #{gnn_forward.3} parent=0 // pred_check_branch
    %417 = sbr.rel (0) target = $region33
  $region32: #{gnn_forward.3} parent=0 // pred_region
    _
  $region33: #{gnn_forward.3} parent=0 // pred_fallthru
    _

// kernel: gnn_forward.5
$region0: #{gnn_forward.5}
  #allocation0 [shape = 'u32[]', space=smem, size = 0x4, offset = 0x4, fixed_abs, tag = 'smem constant byte address 0x4 - core index']
  #allocation1 [shape = 'u32[72,128]{1,0:T(1,128)}', space=vmem, size = 0x9000, scoped, tag = 'internal scratch']
  #allocation2 [shape = 'f32[128,128]{1,0:T(8,128)}', space=vmem, size = 0x10000, scoped, tag = 'scratch operand']
  %s0 = inlined_call_operand.vmem [shape: bf16[128,128], index: 0, kind: input, shape index: {}]
  %s1 = inlined_call_operand.vmem [shape: bf16[128,128], index: 1, kind: input, shape index: {}]
  %s2 = inlined_call_operand.vmem [shape: f32[128,128], index: 2, kind: input, shape index: {}]
  %s3 = inlined_call_operand.vmem [shape: f32[1,128], index: 3, kind: input, shape index: {}]
  %s4 = inlined_call_operand.vmem [shape: f32[128,128], index: 4, kind: input, shape index: {}]
  %s5 = inlined_call_operand.vmem [shape: f32[1,128], index: 5, kind: input, shape index: {}]
  %s6 = inlined_call_operand.vmem [shape: f32[128,128], index: 6, kind: output, shape index: {}]
  %s7 = sld [smem:[#allocation0]]
  $region42: #{gnn_forward.5} parent=0
    _
  %s9 = ssub.s32 1, %s7
  %s10 = scalar_select 0, %s9, %s7
  // Predicated region
  $region2: #{gnn_forward.5} parent=0 // pred_check
    _
  $region3: #{gnn_forward.5} parent=0 // pred_check_branch
    %12 = sbr.rel (0) target = $region5
  $region4: #{gnn_forward.5} parent=0 // pred_region
    _
  $region5: #{gnn_forward.5} parent=0 // pred_fallthru
    _
  // Predicated region
  $region6: #{gnn_forward.5} parent=0 // pred_check
    _
  $region7: #{gnn_forward.5} parent=0 // pred_check_branch
    %14 = sbr.rel (0) target = $region9
  $region8: #{gnn_forward.5} parent=0 // pred_region
    _
  $region9: #{gnn_forward.5} parent=0 // pred_fallthru
    _
  // Predicated region
  $region10: #{gnn_forward.5} parent=0 // pred_check
    _
  $region11: #{gnn_forward.5} parent=0 // pred_check_branch
    %16 = sbr.rel (0) target = $region13
  $region12: #{gnn_forward.5} parent=0 // pred_region
    _
  $region13: #{gnn_forward.5} parent=0 // pred_fallthru
    _
  // Predicated region
  $region14: #{gnn_forward.5} parent=0 // pred_check
    _
  $region15: #{gnn_forward.5} parent=0 // pred_check_branch
    %18 = sbr.rel (0) target = $region17
  $region16: #{gnn_forward.5} parent=0 // pred_region
    _
  $region17: #{gnn_forward.5} parent=0 // pred_fallthru
    _
  // Predicated region
  $region18: #{gnn_forward.5} parent=0 // pred_check
    _
  $region19: #{gnn_forward.5} parent=0 // pred_check_branch
    %20 = sbr.rel (0) target = $region21
  $region20: #{gnn_forward.5} parent=0 // pred_region
    _
  $region21: #{gnn_forward.5} parent=0 // pred_fallthru
    _
  // Predicated region
  $region22: #{gnn_forward.5} parent=0 // pred_check
    _
  $region23: #{gnn_forward.5} parent=0 // pred_check_branch
    %22 = sbr.rel (0) target = $region25
  $region24: #{gnn_forward.5} parent=0 // pred_region
    _
  $region25: #{gnn_forward.5} parent=0 // pred_fallthru
    _
  %p23 = scmp.eq.s32.totalorder 0, 0
  // Predicated region
  $region26: #{gnn_forward.5} parent=0 // pred_check
    %p24 = pneg %p23
  $region27: #{gnn_forward.5} parent=0 // pred_check_branch
    %26 = sbr.rel (%p24) target = $region29
  $region28: #{gnn_forward.5} parent=0 // pred_region
    %27 = vst [vmem:[#allocation2] sm:$0xff] 0.0
    %28 = vst [vmem:[#allocation2 + $0x8] sm:$0xff] 0.0
    %29 = vst [vmem:[#allocation2 + $0x10] sm:$0xff] 0.0
    %30 = vst [vmem:[#allocation2 + $0x18] sm:$0xff] 0.0
    %31 = vst [vmem:[#allocation2 + $0x20] sm:$0xff] 0.0
    %32 = vst [vmem:[#allocation2 + $0x28] sm:$0xff] 0.0
    %33 = vst [vmem:[#allocation2 + $0x30] sm:$0xff] 0.0
    %34 = vst [vmem:[#allocation2 + $0x38] sm:$0xff] 0.0
    %35 = vst [vmem:[#allocation2 + $0x40] sm:$0xff] 0.0
    %36 = vst [vmem:[#allocation2 + $0x48] sm:$0xff] 0.0
    %37 = vst [vmem:[#allocation2 + $0x50] sm:$0xff] 0.0
    %38 = vst [vmem:[#allocation2 + $0x58] sm:$0xff] 0.0
    %39 = vst [vmem:[#allocation2 + $0x60] sm:$0xff] 0.0
    %40 = vst [vmem:[#allocation2 + $0x68] sm:$0xff] 0.0
    %41 = vst [vmem:[#allocation2 + $0x70] sm:$0xff] 0.0
    %42 = vst [vmem:[#allocation2 + $0x78] sm:$0xff] 0.0
  $region29: #{gnn_forward.5} parent=0 // pred_fallthru
    _
  %v43 = vld [vmem:[#allocation2] sm:$0xff]
  %v44 = vld [vmem:[#allocation2 + $0x8] sm:$0xff]
  %v45 = vld [vmem:[#allocation2 + $0x10] sm:$0xff]
  %v46 = vld [vmem:[#allocation2 + $0x18] sm:$0xff]
  %v47 = vld [vmem:[#allocation2 + $0x20] sm:$0xff]
  %v48 = vld [vmem:[#allocation2 + $0x28] sm:$0xff]
  %v49 = vld [vmem:[#allocation2 + $0x30] sm:$0xff]
  %v50 = vld [vmem:[#allocation2 + $0x38] sm:$0xff]
  %v51 = vld [vmem:[#allocation2 + $0x40] sm:$0xff]
  %v52 = vld [vmem:[#allocation2 + $0x48] sm:$0xff]
  %v53 = vld [vmem:[#allocation2 + $0x50] sm:$0xff]
  %v54 = vld [vmem:[#allocation2 + $0x58] sm:$0xff]
  %v55 = vld [vmem:[#allocation2 + $0x60] sm:$0xff]
  %v56 = vld [vmem:[#allocation2 + $0x68] sm:$0xff]
  %v57 = vld [vmem:[#allocation2 + $0x70] sm:$0xff]
  %v58 = vld [vmem:[#allocation2 + $0x78] sm:$0xff]
  %v59 = vld [vmem:[%s0] sm:$0xf]
  %v60 = vld [vmem:[%s0 + $0x4] sm:$0xf]
  %v61 = vld [vmem:[%s0 + $0x8] sm:$0xf]
  %v62 = vld [vmem:[%s0 + $0xc] sm:$0xf]
  %v63 = vld [vmem:[%s0 + $0x10] sm:$0xf]
  %v64 = vld [vmem:[%s0 + $0x14] sm:$0xf]
  %v65 = vld [vmem:[%s0 + $0x18] sm:$0xf]
  %v66 = vld [vmem:[%s0 + $0x1c] sm:$0xf]
  %v67 = vld [vmem:[%s0 + $0x20] sm:$0xf]
  %v68 = vld [vmem:[%s0 + $0x24] sm:$0xf]
  %v69 = vld [vmem:[%s0 + $0x28] sm:$0xf]
  %v70 = vld [vmem:[%s0 + $0x2c] sm:$0xf]
  %v71 = vld [vmem:[%s0 + $0x30] sm:$0xf]
  %v72 = vld [vmem:[%s0 + $0x34] sm:$0xf]
  %v73 = vld [vmem:[%s0 + $0x38] sm:$0xf]
  %v74 = vld [vmem:[%s0 + $0x3c] sm:$0xf]
  %v75 = vld [vmem:[%s1] sm:$0xf]
  %v76 = vld [vmem:[%s1 + $0x4] sm:$0xf]
  %v77 = vld [vmem:[%s1 + $0x8] sm:$0xf]
  %v78 = vld [vmem:[%s1 + $0xc] sm:$0xf]
  %v79 = vld [vmem:[%s1 + $0x10] sm:$0xf]
  %v80 = vld [vmem:[%s1 + $0x14] sm:$0xf]
  %v81 = vld [vmem:[%s1 + $0x18] sm:$0xf]
  %v82 = vld [vmem:[%s1 + $0x1c] sm:$0xf]
  %v83 = vld [vmem:[%s1 + $0x20] sm:$0xf]
  %v84 = vld [vmem:[%s1 + $0x24] sm:$0xf]
  %v85 = vld [vmem:[%s1 + $0x28] sm:$0xf]
  %v86 = vld [vmem:[%s1 + $0x2c] sm:$0xf]
  %v87 = vld [vmem:[%s1 + $0x30] sm:$0xf]
  %v88 = vld [vmem:[%s1 + $0x34] sm:$0xf]
  %v89 = vld [vmem:[%s1 + $0x38] sm:$0xf]
  %v90 = vld [vmem:[%s1 + $0x3c] sm:$0xf]
  %v107 = vunpack.c.l.b16 %v59
  %v108 = vunpack.c.l.b16 %v60
  %v109 = vunpack.c.l.b16 %v61
  %v110 = vunpack.c.l.b16 %v62
  %v111 = vunpack.c.l.b16 %v63
  %v112 = vunpack.c.l.b16 %v64
  %v113 = vunpack.c.l.b16 %v65
  %v114 = vunpack.c.l.b16 %v66
  %v115 = vunpack.c.l.b16 %v67
  %v116 = vunpack.c.l.b16 %v68
  %v117 = vunpack.c.l.b16 %v69
  %v118 = vunpack.c.l.b16 %v70
  %v119 = vunpack.c.l.b16 %v71
  %v120 = vunpack.c.l.b16 %v72
  %v121 = vunpack.c.l.b16 %v73
  %v122 = vunpack.c.l.b16 %v74
  %v123 = vpack.c.b16 %v108, %v107
  %v124 = vpack.c.b16 %v110, %v109
  %v125 = vpack.c.b16 %v112, %v111
  %v126 = vpack.c.b16 %v114, %v113
  %v127 = vpack.c.b16 %v116, %v115
  %v128 = vpack.c.b16 %v118, %v117
  %v129 = vpack.c.b16 %v120, %v119
  %v130 = vpack.c.b16 %v122, %v121
  %v155 = vunpack.c.l.b16 %v75
  %v156 = vunpack.c.l.b16 %v76
  %v157 = vunpack.c.l.b16 %v77
  %v158 = vunpack.c.l.b16 %v78
  %v159 = vunpack.c.l.b16 %v79
  %v160 = vunpack.c.l.b16 %v80
  %v161 = vunpack.c.l.b16 %v81
  %v162 = vunpack.c.l.b16 %v82
  %v163 = vunpack.c.l.b16 %v83
  %v164 = vunpack.c.l.b16 %v84
  %v165 = vunpack.c.l.b16 %v85
  %v166 = vunpack.c.l.b16 %v86
  %v167 = vunpack.c.l.b16 %v87
  %v168 = vunpack.c.l.b16 %v88
  %v169 = vunpack.c.l.b16 %v89
  %v170 = vunpack.c.l.b16 %v90
  %v171 = vpack.c.b16 %v156, %v155
  %v172 = vpack.c.b16 %v158, %v157
  %v173 = vpack.c.b16 %v160, %v159
  %v174 = vpack.c.b16 %v162, %v161
  %v175 = vpack.c.b16 %v164, %v163
  %v176 = vpack.c.b16 %v166, %v165
  %v177 = vpack.c.b16 %v168, %v167
  %v178 = vpack.c.b16 %v170, %v169
  %187 = vmatpush.bf16.msra.mxu0 %v178
  %188 = vmatpush.bf16.msra.mxu0 %v177
  %189 = vmatpush.bf16.msra.mxu0 %v176
  %190 = vmatpush.bf16.msra.mxu0 %v175
  %191 = vmatpush.bf16.msra.mxu0 %v174
  %192 = vmatpush.bf16.msra.mxu0 %v173
  %193 = vmatpush.bf16.msra.mxu0 %v172
  %194 = vmatpush.bf16.msra.mxu0 %v171
  %195 = vmatmul.bf16.gmra.mxu0 %v123
  %v196 = vpop.f32.mrf.mxu0
  %v197 = vadd.f32 0.0, %v196
  %v198 = vpop.f32.mrf.mxu0
  %v199 = vadd.f32 0.0, %v198
  %200 = vmatmul.bf16.gmra.mxu0 %v124
  %v201 = vpop.f32.mrf.mxu0
  %v202 = vadd.f32 0.0, %v201
  %v203 = vpop.f32.mrf.mxu0
  %v204 = vadd.f32 0.0, %v203
  %205 = vmatmul.bf16.gmra.mxu0 %v125
  %v206 = vpop.f32.mrf.mxu0
  %v207 = vadd.f32 0.0, %v206
  %v208 = vpop.f32.mrf.mxu0
  %v209 = vadd.f32 0.0, %v208
  %210 = vmatmul.bf16.gmra.mxu0 %v126
  %v211 = vpop.f32.mrf.mxu0
  %v212 = vadd.f32 0.0, %v211
  %v213 = vpop.f32.mrf.mxu0
  %v214 = vadd.f32 0.0, %v213
  %215 = vmatmul.bf16.gmra.mxu0 %v127
  %v216 = vpop.f32.mrf.mxu0
  %v217 = vadd.f32 0.0, %v216
  %v218 = vpop.f32.mrf.mxu0
  %v219 = vadd.f32 0.0, %v218
  %220 = vmatmul.bf16.gmra.mxu0 %v128
  %v221 = vpop.f32.mrf.mxu0
  %v222 = vadd.f32 0.0, %v221
  %v223 = vpop.f32.mrf.mxu0
  %v224 = vadd.f32 0.0, %v223
  %225 = vmatmul.bf16.gmra.mxu0 %v129
  %v226 = vpop.f32.mrf.mxu0
  %v227 = vadd.f32 0.0, %v226
  %v228 = vpop.f32.mrf.mxu0
  %v229 = vadd.f32 0.0, %v228
  %230 = vmatmul.bf16.gmra.mxu0 %v130
  %v231 = vpop.f32.mrf.mxu0
  %v232 = vadd.f32 0.0, %v231
  %v233 = vpop.f32.mrf.mxu0
  %v234 = vadd.f32 0.0, %v233
  %235 = vdwg.mxu0
  %v236 = vadd.f32 %v43, %v197
  %v237 = vadd.f32 %v44, %v199
  %v238 = vadd.f32 %v45, %v202
  %v239 = vadd.f32 %v46, %v204
  %v240 = vadd.f32 %v47, %v207
  %v241 = vadd.f32 %v48, %v209
  %v242 = vadd.f32 %v49, %v212
  %v243 = vadd.f32 %v50, %v214
  %v244 = vadd.f32 %v51, %v217
  %v245 = vadd.f32 %v52, %v219
  %v246 = vadd.f32 %v53, %v222
  %v247 = vadd.f32 %v54, %v224
  %v248 = vadd.f32 %v55, %v227
  %v249 = vadd.f32 %v56, %v229
  %v250 = vadd.f32 %v57, %v232
  %v251 = vadd.f32 %v58, %v234
  %252 = vst [vmem:[#allocation2] sm:$0xff] %v236
  %253 = vst [vmem:[#allocation2 + $0x8] sm:$0xff] %v237
  %254 = vst [vmem:[#allocation2 + $0x10] sm:$0xff] %v238
  %255 = vst [vmem:[#allocation2 + $0x18] sm:$0xff] %v239
  %256 = vst [vmem:[#allocation2 + $0x20] sm:$0xff] %v240
  %257 = vst [vmem:[#allocation2 + $0x28] sm:$0xff] %v241
  %258 = vst [vmem:[#allocation2 + $0x30] sm:$0xff] %v242
  %259 = vst [vmem:[#allocation2 + $0x38] sm:$0xff] %v243
  %260 = vst [vmem:[#allocation2 + $0x40] sm:$0xff] %v244
  %261 = vst [vmem:[#allocation2 + $0x48] sm:$0xff] %v245
  %262 = vst [vmem:[#allocation2 + $0x50] sm:$0xff] %v246
  %263 = vst [vmem:[#allocation2 + $0x58] sm:$0xff] %v247
  %264 = vst [vmem:[#allocation2 + $0x60] sm:$0xff] %v248
  %265 = vst [vmem:[#allocation2 + $0x68] sm:$0xff] %v249
  %266 = vst [vmem:[#allocation2 + $0x70] sm:$0xff] %v250
  %267 = vst [vmem:[#allocation2 + $0x78] sm:$0xff] %v251
  // Predicated region
  $region30: #{gnn_forward.5} parent=0 // pred_check
    %p268 = pneg %p23
  $region31: #{gnn_forward.5} parent=0 // pred_check_branch
    %270 = sbr.rel (%p268) target = $region33
  $region32: #{gnn_forward.5} parent=0 // pred_region
    %v271 = vld [vmem:[#allocation2] sm:$0xff]
    %v272 = vld [vmem:[#allocation2 + $0x8] sm:$0xff]
    %v273 = vld [vmem:[#allocation2 + $0x10] sm:$0xff]
    %v274 = vld [vmem:[#allocation2 + $0x18] sm:$0xff]
    %v275 = vld [vmem:[#allocation2 + $0x20] sm:$0xff]
    %v276 = vld [vmem:[#allocation2 + $0x28] sm:$0xff]
    %v277 = vld [vmem:[#allocation2 + $0x30] sm:$0xff]
    %v278 = vld [vmem:[#allocation2 + $0x38] sm:$0xff]
    %v279 = vld [vmem:[#allocation2 + $0x40] sm:$0xff]
    %v280 = vld [vmem:[#allocation2 + $0x48] sm:$0xff]
    %v281 = vld [vmem:[#allocation2 + $0x50] sm:$0xff]
    %v282 = vld [vmem:[#allocation2 + $0x58] sm:$0xff]
    %v283 = vld [vmem:[#allocation2 + $0x60] sm:$0xff]
    %v284 = vld [vmem:[#allocation2 + $0x68] sm:$0xff]
    %v285 = vld [vmem:[#allocation2 + $0x70] sm:$0xff]
    %v286 = vld [vmem:[#allocation2 + $0x78] sm:$0xff]
    %v287 = vld [vmem:[%s2] sm:$0xff]
    %v288 = vld [vmem:[%s2 + $0x8] sm:$0xff]
    %v289 = vld [vmem:[%s2 + $0x10] sm:$0xff]
    %v290 = vld [vmem:[%s2 + $0x18] sm:$0xff]
    %v291 = vld [vmem:[%s2 + $0x20] sm:$0xff]
    %v292 = vld [vmem:[%s2 + $0x28] sm:$0xff]
    %v293 = vld [vmem:[%s2 + $0x30] sm:$0xff]
    %v294 = vld [vmem:[%s2 + $0x38] sm:$0xff]
    %v295 = vld [vmem:[%s2 + $0x40] sm:$0xff]
    %v296 = vld [vmem:[%s2 + $0x48] sm:$0xff]
    %v297 = vld [vmem:[%s2 + $0x50] sm:$0xff]
    %v298 = vld [vmem:[%s2 + $0x58] sm:$0xff]
    %v299 = vld [vmem:[%s2 + $0x60] sm:$0xff]
    %v300 = vld [vmem:[%s2 + $0x68] sm:$0xff]
    %v301 = vld [vmem:[%s2 + $0x70] sm:$0xff]
    %v302 = vld [vmem:[%s2 + $0x78] sm:$0xff]
    %v303 = vld [vmem:[%s3] sm:$0x1]
    %v305 = vperm.slane %v303, 0
    %307 = vmatpush.msra.mxu0 %v302
    %308 = vmatpush.msra.mxu0 %v301
    %309 = vmatpush.msra.mxu0 %v300
    %310 = vmatpush.msra.mxu0 %v299
    %311 = vmatpush.msra.mxu0 %v298
    %312 = vmatpush.msra.mxu0 %v297
    %313 = vmatpush.msra.mxu0 %v296
    %314 = vmatpush.msra.mxu0 %v295
    %315 = vmatpush.msra.mxu0 %v294
    %316 = vmatpush.msra.mxu0 %v293
    %317 = vmatpush.msra.mxu0 %v292
    %318 = vmatpush.msra.mxu0 %v291
    %319 = vmatpush.msra.mxu0 %v290
    %320 = vmatpush.msra.mxu0 %v289
    %321 = vmatpush.msra.mxu0 %v288
    %322 = vmatpush.msra.mxu0 %v287
    %323 = vmatmul.f32.gmra.mxu0 %v271
    %v324 = vpop.f32.mrf.mxu0
    %v325 = vadd.f32 %v305, %v324
    %326 = vmatmul.f32.gmra.mxu0 %v272
    %v327 = vpop.f32.mrf.mxu0
    %v328 = vadd.f32 %v305, %v327
    %329 = vmatmul.f32.gmra.mxu0 %v273
    %v330 = vpop.f32.mrf.mxu0
    %v331 = vadd.f32 %v305, %v330
    %332 = vmatmul.f32.gmra.mxu0 %v274
    %v333 = vpop.f32.mrf.mxu0
    %v334 = vadd.f32 %v305, %v333
    %335 = vmatmul.f32.gmra.mxu0 %v275
    %v336 = vpop.f32.mrf.mxu0
    %v337 = vadd.f32 %v305, %v336
    %338 = vmatmul.f32.gmra.mxu0 %v276
    %v339 = vpop.f32.mrf.mxu0
    %v340 = vadd.f32 %v305, %v339
    %341 = vmatmul.f32.gmra.mxu0 %v277
    %v342 = vpop.f32.mrf.mxu0
    %v343 = vadd.f32 %v305, %v342
    %344 = vmatmul.f32.gmra.mxu0 %v278
    %v345 = vpop.f32.mrf.mxu0
    %v346 = vadd.f32 %v305, %v345
    %347 = vmatmul.f32.gmra.mxu0 %v279
    %v348 = vpop.f32.mrf.mxu0
    %v349 = vadd.f32 %v305, %v348
    %350 = vmatmul.f32.gmra.mxu0 %v280
    %v351 = vpop.f32.mrf.mxu0
    %v352 = vadd.f32 %v305, %v351
    %353 = vmatmul.f32.gmra.mxu0 %v281
    %v354 = vpop.f32.mrf.mxu0
    %v355 = vadd.f32 %v305, %v354
    %356 = vmatmul.f32.gmra.mxu0 %v282
    %v357 = vpop.f32.mrf.mxu0
    %v358 = vadd.f32 %v305, %v357
    %359 = vmatmul.f32.gmra.mxu0 %v283
    %v360 = vpop.f32.mrf.mxu0
    %v361 = vadd.f32 %v305, %v360
    %362 = vmatmul.f32.gmra.mxu0 %v284
    %v363 = vpop.f32.mrf.mxu0
    %v364 = vadd.f32 %v305, %v363
    %365 = vmatmul.f32.gmra.mxu0 %v285
    %v366 = vpop.f32.mrf.mxu0
    %v367 = vadd.f32 %v305, %v366
    %368 = vmatmul.f32.gmra.mxu0 %v286
    %v369 = vpop.f32.mrf.mxu0
    %v370 = vadd.f32 %v305, %v369
    %371 = vdwg.mxu0
    %v372 = vmax.f32 %v325, 0.0
    %v373 = vmax.f32 %v328, 0.0
    %v374 = vmax.f32 %v331, 0.0
    %v375 = vmax.f32 %v334, 0.0
    %v376 = vmax.f32 %v337, 0.0
    %v377 = vmax.f32 %v340, 0.0
    %v378 = vmax.f32 %v343, 0.0
    %v379 = vmax.f32 %v346, 0.0
    %v380 = vmax.f32 %v349, 0.0
    %v381 = vmax.f32 %v352, 0.0
    %v382 = vmax.f32 %v355, 0.0
    %v383 = vmax.f32 %v358, 0.0
    %v384 = vmax.f32 %v361, 0.0
    %v385 = vmax.f32 %v364, 0.0
    %v386 = vmax.f32 %v367, 0.0
    %v387 = vmax.f32 %v370, 0.0
    %v388 = vld [vmem:[%s4] sm:$0xff]
    %v389 = vld [vmem:[%s4 + $0x8] sm:$0xff]
    %v390 = vld [vmem:[%s4 + $0x10] sm:$0xff]
    %v391 = vld [vmem:[%s4 + $0x18] sm:$0xff]
    %v392 = vld [vmem:[%s4 + $0x20] sm:$0xff]
    %v393 = vld [vmem:[%s4 + $0x28] sm:$0xff]
    %v394 = vld [vmem:[%s4 + $0x30] sm:$0xff]
    %v395 = vld [vmem:[%s4 + $0x38] sm:$0xff]
    %v396 = vld [vmem:[%s4 + $0x40] sm:$0xff]
    %v397 = vld [vmem:[%s4 + $0x48] sm:$0xff]
    %v398 = vld [vmem:[%s4 + $0x50] sm:$0xff]
    %v399 = vld [vmem:[%s4 + $0x58] sm:$0xff]
    %v400 = vld [vmem:[%s4 + $0x60] sm:$0xff]
    %v401 = vld [vmem:[%s4 + $0x68] sm:$0xff]
    %v402 = vld [vmem:[%s4 + $0x70] sm:$0xff]
    %v403 = vld [vmem:[%s4 + $0x78] sm:$0xff]
    %v404 = vld [vmem:[%s5] sm:$0x1]
    %v406 = vperm.slane %v404, 0
    %408 = vmatpush.msra.mxu0 %v403
    %409 = vmatpush.msra.mxu0 %v402
    %410 = vmatpush.msra.mxu0 %v401
    %411 = vmatpush.msra.mxu0 %v400
    %412 = vmatpush.msra.mxu0 %v399
    %413 = vmatpush.msra.mxu0 %v398
    %414 = vmatpush.msra.mxu0 %v397
    %415 = vmatpush.msra.mxu0 %v396
    %416 = vmatpush.msra.mxu0 %v395
    %417 = vmatpush.msra.mxu0 %v394
    %418 = vmatpush.msra.mxu0 %v393
    %419 = vmatpush.msra.mxu0 %v392
    %420 = vmatpush.msra.mxu0 %v391
    %421 = vmatpush.msra.mxu0 %v390
    %422 = vmatpush.msra.mxu0 %v389
    %423 = vmatpush.msra.mxu0 %v388
    %424 = vmatmul.f32.gmra.mxu0 %v372
    %v425 = vpop.f32.mrf.mxu0
    %v426 = vadd.f32 %v406, %v425
    %427 = vmatmul.f32.gmra.mxu0 %v373
    %v428 = vpop.f32.mrf.mxu0
    %v429 = vadd.f32 %v406, %v428
    %430 = vmatmul.f32.gmra.mxu0 %v374
    %v431 = vpop.f32.mrf.mxu0
    %v432 = vadd.f32 %v406, %v431
    %433 = vmatmul.f32.gmra.mxu0 %v375
    %v434 = vpop.f32.mrf.mxu0
    %v435 = vadd.f32 %v406, %v434
    %436 = vmatmul.f32.gmra.mxu0 %v376
    %v437 = vpop.f32.mrf.mxu0
    %v438 = vadd.f32 %v406, %v437
    %439 = vmatmul.f32.gmra.mxu0 %v377
    %v440 = vpop.f32.mrf.mxu0
    %v441 = vadd.f32 %v406, %v440
    %442 = vmatmul.f32.gmra.mxu0 %v378
    %v443 = vpop.f32.mrf.mxu0
    %v444 = vadd.f32 %v406, %v443
    %445 = vmatmul.f32.gmra.mxu0 %v379
    %v446 = vpop.f32.mrf.mxu0
    %v447 = vadd.f32 %v406, %v446
    %448 = vmatmul.f32.gmra.mxu0 %v380
    %v449 = vpop.f32.mrf.mxu0
    %v450 = vadd.f32 %v406, %v449
    %451 = vmatmul.f32.gmra.mxu0 %v381
    %v452 = vpop.f32.mrf.mxu0
    %v453 = vadd.f32 %v406, %v452
    %454 = vmatmul.f32.gmra.mxu0 %v382
    %v455 = vpop.f32.mrf.mxu0
    %v456 = vadd.f32 %v406, %v455
    %457 = vmatmul.f32.gmra.mxu0 %v383
    %v458 = vpop.f32.mrf.mxu0
    %v459 = vadd.f32 %v406, %v458
    %460 = vmatmul.f32.gmra.mxu0 %v384
    %v461 = vpop.f32.mrf.mxu0
    %v462 = vadd.f32 %v406, %v461
    %463 = vmatmul.f32.gmra.mxu0 %v385
    %v464 = vpop.f32.mrf.mxu0
    %v465 = vadd.f32 %v406, %v464
    %466 = vmatmul.f32.gmra.mxu0 %v386
    %v467 = vpop.f32.mrf.mxu0
    %v468 = vadd.f32 %v406, %v467
    %469 = vmatmul.f32.gmra.mxu0 %v387
    %v470 = vpop.f32.mrf.mxu0
    %v471 = vadd.f32 %v406, %v470
    %472 = vdwg.mxu0
    %v473 = vlaneseq
    %v474 = vand.u32 %v473, 127
    %vm475 = vcmp.lt.s32.totalorder %v474, 4
    %v476 = vsel %vm475, %v426, -1e+30
    %v477 = vsel %vm475, %v429, -1e+30
    %v478 = vsel %vm475, %v432, -1e+30
    %v479 = vsel %vm475, %v435, -1e+30
    %v480 = vsel %vm475, %v438, -1e+30
    %v481 = vsel %vm475, %v441, -1e+30
    %v482 = vsel %vm475, %v444, -1e+30
    %v483 = vsel %vm475, %v447, -1e+30
    %v484 = vsel %vm475, %v450, -1e+30
    %v485 = vsel %vm475, %v453, -1e+30
    %v486 = vsel %vm475, %v456, -1e+30
    %v487 = vsel %vm475, %v459, -1e+30
    %v488 = vsel %vm475, %v462, -1e+30
    %v489 = vsel %vm475, %v465, -1e+30
    %v490 = vsel %vm475, %v468, -1e+30
    %v491 = vsel %vm475, %v471, -1e+30
    %492 = vmax.xlane.f32.xlu0 %v476
    %v493 = vpop.xlane.xlu0 %492
    %494 = vmax.xlane.f32.xlu0 %v477
    %v495 = vpop.xlane.xlu0 %494
    %496 = vmax.xlane.f32.xlu0 %v478
    %v497 = vpop.xlane.xlu0 %496
    %498 = vmax.xlane.f32.xlu0 %v479
    %v499 = vpop.xlane.xlu0 %498
    %500 = vmax.xlane.f32.xlu0 %v480
    %v501 = vpop.xlane.xlu0 %500
    %502 = vmax.xlane.f32.xlu0 %v481
    %v503 = vpop.xlane.xlu0 %502
    %504 = vmax.xlane.f32.xlu0 %v482
    %v505 = vpop.xlane.xlu0 %504
    %506 = vmax.xlane.f32.xlu0 %v483
    %v507 = vpop.xlane.xlu0 %506
    %508 = vmax.xlane.f32.xlu0 %v484
    %v509 = vpop.xlane.xlu0 %508
    %510 = vmax.xlane.f32.xlu0 %v485
    %v511 = vpop.xlane.xlu0 %510
    %512 = vmax.xlane.f32.xlu0 %v486
    %v513 = vpop.xlane.xlu0 %512
    %514 = vmax.xlane.f32.xlu0 %v487
    %v515 = vpop.xlane.xlu0 %514
    %516 = vmax.xlane.f32.xlu0 %v488
    %v517 = vpop.xlane.xlu0 %516
    %518 = vmax.xlane.f32.xlu0 %v489
    %v519 = vpop.xlane.xlu0 %518
    %520 = vmax.xlane.f32.xlu0 %v490
    %v521 = vpop.xlane.xlu0 %520
    %522 = vmax.xlane.f32.xlu0 %v491
    %v523 = vpop.xlane.xlu0 %522
    %v524 = vsub.f32 %v476, %v493
    %v525 = vsub.f32 %v477, %v495
    %v526 = vsub.f32 %v478, %v497
    %v527 = vsub.f32 %v479, %v499
    %v528 = vsub.f32 %v480, %v501
    %v529 = vsub.f32 %v481, %v503
    %v530 = vsub.f32 %v482, %v505
    %v531 = vsub.f32 %v483, %v507
    %v532 = vsub.f32 %v484, %v509
    %v533 = vsub.f32 %v485, %v511
    %v534 = vsub.f32 %v486, %v513
    %v535 = vsub.f32 %v487, %v515
    %v536 = vsub.f32 %v488, %v517
    %v537 = vsub.f32 %v489, %v519
    %v538 = vsub.f32 %v490, %v521
    %v539 = vsub.f32 %v491, %v523
    %v540 = vmul.f32 %v524, 1.442695
    %v541 = vpow.pop %v540
    %v542 = vmul.f32 %v525, 1.442695
    %v543 = vpow.pop %v542
    %v544 = vmul.f32 %v526, 1.442695
    %v545 = vpow.pop %v544
    %v546 = vmul.f32 %v527, 1.442695
    %v547 = vpow.pop %v546
    %v548 = vmul.f32 %v528, 1.442695
    %v549 = vpow.pop %v548
    %v550 = vmul.f32 %v529, 1.442695
    %v551 = vpow.pop %v550
    %v552 = vmul.f32 %v530, 1.442695
    %v553 = vpow.pop %v552
    %v554 = vmul.f32 %v531, 1.442695
    %v555 = vpow.pop %v554
    %v556 = vmul.f32 %v532, 1.442695
    %v557 = vpow.pop %v556
    %v558 = vmul.f32 %v533, 1.442695
    %v559 = vpow.pop %v558
    %v560 = vmul.f32 %v534, 1.442695
    %v561 = vpow.pop %v560
    %v562 = vmul.f32 %v535, 1.442695
    %v563 = vpow.pop %v562
    %v564 = vmul.f32 %v536, 1.442695
    %v565 = vpow.pop %v564
    %v566 = vmul.f32 %v537, 1.442695
    %v567 = vpow.pop %v566
    %v568 = vmul.f32 %v538, 1.442695
    %v569 = vpow.pop %v568
    %v570 = vmul.f32 %v539, 1.442695
    %v571 = vpow.pop %v570
    %572 = vadd.xlane.f32.xlu0 %v541
    %v573 = vpop.xlane.xlu0 %572
    %574 = vadd.xlane.f32.xlu0 %v543
    %v575 = vpop.xlane.xlu0 %574
    %576 = vadd.xlane.f32.xlu0 %v545
    %v577 = vpop.xlane.xlu0 %576
    %578 = vadd.xlane.f32.xlu0 %v547
    %v579 = vpop.xlane.xlu0 %578
    %580 = vadd.xlane.f32.xlu0 %v549
    %v581 = vpop.xlane.xlu0 %580
    %582 = vadd.xlane.f32.xlu0 %v551
    %v583 = vpop.xlane.xlu0 %582
    %584 = vadd.xlane.f32.xlu0 %v553
    %v585 = vpop.xlane.xlu0 %584
    %586 = vadd.xlane.f32.xlu0 %v555
    %v587 = vpop.xlane.xlu0 %586
    %588 = vadd.xlane.f32.xlu0 %v557
    %v589 = vpop.xlane.xlu0 %588
    %590 = vadd.xlane.f32.xlu0 %v559
    %v591 = vpop.xlane.xlu0 %590
    %592 = vadd.xlane.f32.xlu0 %v561
    %v593 = vpop.xlane.xlu0 %592
    %594 = vadd.xlane.f32.xlu0 %v563
    %v595 = vpop.xlane.xlu0 %594
    %596 = vadd.xlane.f32.xlu0 %v565
    %v597 = vpop.xlane.xlu0 %596
    %598 = vadd.xlane.f32.xlu0 %v567
    %v599 = vpop.xlane.xlu0 %598
    %600 = vadd.xlane.f32.xlu0 %v569
    %v601 = vpop.xlane.xlu0 %600
    %602 = vadd.xlane.f32.xlu0 %v571
    %v603 = vpop.xlane.xlu0 %602
    %v604 = vlog2.pop %v573
    %v605 = vmul.f32 %v604, 0.6931472
    %v606 = vlog2.pop %v575
    %v607 = vmul.f32 %v606, 0.6931472
    %v608 = vlog2.pop %v577
    %v609 = vmul.f32 %v608, 0.6931472
    %v610 = vlog2.pop %v579
    %v611 = vmul.f32 %v610, 0.6931472
    %v612 = vlog2.pop %v581
    %v613 = vmul.f32 %v612, 0.6931472
    %v614 = vlog2.pop %v583
    %v615 = vmul.f32 %v614, 0.6931472
    %v616 = vlog2.pop %v585
    %v617 = vmul.f32 %v616, 0.6931472
    %v618 = vlog2.pop %v587
    %v619 = vmul.f32 %v618, 0.6931472
    %v620 = vlog2.pop %v589
    %v621 = vmul.f32 %v620, 0.6931472
    %v622 = vlog2.pop %v591
    %v623 = vmul.f32 %v622, 0.6931472
    %v624 = vlog2.pop %v593
    %v625 = vmul.f32 %v624, 0.6931472
    %v626 = vlog2.pop %v595
    %v627 = vmul.f32 %v626, 0.6931472
    %v628 = vlog2.pop %v597
    %v629 = vmul.f32 %v628, 0.6931472
    %v630 = vlog2.pop %v599
    %v631 = vmul.f32 %v630, 0.6931472
    %v632 = vlog2.pop %v601
    %v633 = vmul.f32 %v632, 0.6931472
    %v634 = vlog2.pop %v603
    %v635 = vmul.f32 %v634, 0.6931472
    %v636 = vsub.f32 %v524, %v605
    %v637 = vsub.f32 %v525, %v607
    %v638 = vsub.f32 %v526, %v609
    %v639 = vsub.f32 %v527, %v611
    %v640 = vsub.f32 %v528, %v613
    %v641 = vsub.f32 %v529, %v615
    %v642 = vsub.f32 %v530, %v617
    %v643 = vsub.f32 %v531, %v619
    %v644 = vsub.f32 %v532, %v621
    %v645 = vsub.f32 %v533, %v623
    %v646 = vsub.f32 %v534, %v625
    %v647 = vsub.f32 %v535, %v627
    %v648 = vsub.f32 %v536, %v629
    %v649 = vsub.f32 %v537, %v631
    %v650 = vsub.f32 %v538, %v633
    %v651 = vsub.f32 %v539, %v635
    %652 = vst [vmem:[%s6] sm:$0xff] %v636
    %653 = vst [vmem:[%s6 + $0x8] sm:$0xff] %v637
    %654 = vst [vmem:[%s6 + $0x10] sm:$0xff] %v638
    %655 = vst [vmem:[%s6 + $0x18] sm:$0xff] %v639
    %656 = vst [vmem:[%s6 + $0x20] sm:$0xff] %v640
    %657 = vst [vmem:[%s6 + $0x28] sm:$0xff] %v641
    %658 = vst [vmem:[%s6 + $0x30] sm:$0xff] %v642
    %659 = vst [vmem:[%s6 + $0x38] sm:$0xff] %v643
    %660 = vst [vmem:[%s6 + $0x40] sm:$0xff] %v644
    %661 = vst [vmem:[%s6 + $0x48] sm:$0xff] %v645
    %662 = vst [vmem:[%s6 + $0x50] sm:$0xff] %v646
    %663 = vst [vmem:[%s6 + $0x58] sm:$0xff] %v647
    %664 = vst [vmem:[%s6 + $0x60] sm:$0xff] %v648
    %665 = vst [vmem:[%s6 + $0x68] sm:$0xff] %v649
    %666 = vst [vmem:[%s6 + $0x70] sm:$0xff] %v650
    %667 = vst [vmem:[%s6 + $0x78] sm:$0xff] %v651
  $region33: #{gnn_forward.5} parent=0 // pred_fallthru
    _
  // Predicated region
  $region34: #{gnn_forward.5} parent=0 // pred_check
    _
  $region35: #{gnn_forward.5} parent=0 // pred_check_branch
    %669 = sbr.rel (0) target = $region37
  $region36: #{gnn_forward.5} parent=0 // pred_region
    _
  $region37: #{gnn_forward.5} parent=0 // pred_fallthru
    _
  // Predicated region
  $region38: #{gnn_forward.5} parent=0 // pred_check
    _
  $region39: #{gnn_forward.5} parent=0 // pred_check_branch
    %671 = sbr.rel (0) target = $region41
  $region40: #{gnn_forward.5} parent=0 // pred_region
    _
  $region41: #{gnn_forward.5} parent=0 // pred_fallthru
    _

</llo_original>
